<compile_context>
chip_gen: v7x
topology: tpu7x:2x2x1
jax: 0.10.0
libtpu: 0.0.40
codegen_flags: <defaults>
</compile_context>

<pallas_src>
import functools

import jax
import jax.numpy as jnp
from jax import lax
from jax.experimental import pallas as pl
from jax.experimental.pallas import tpu as pltpu

LANES = 128
SUBLANES = 8
DEFAULT_TILE_ROWS = 512  # 512*128 f32 = 256 KiB per input tile


def _focal_elementwise(x, t, alpha, gamma):
    """FocalLoss math on one tile, in f32 (VPU/EUP), matching the torch module."""
    xf = x.astype(jnp.float32)
    tf = t.astype(jnp.float32)
    # StableBCELoss == binary_cross_entropy_with_logits (reduction='none').
    bce = jnp.maximum(xf, 0.0) - xf * tf + jnp.log1p(jnp.exp(-jnp.abs(xf)))
    pt = jnp.exp(-bce)
    q = 1.0 - pt
    g = float(gamma)
    if g == 2.0:
        w = q * q          # avoid pow -> exp(gamma*log(.)) (2 extra EUP transcendentals)
    elif g == 1.0:
        w = q
    elif g == 0.0:
        w = jnp.ones_like(q)
    else:
        w = q ** g
    return (float(alpha) * w) * bce


def _focal_reduce_kernel(n_ref, x_ref, t_ref, psum_ref, acc_ref, *,
                         alpha, gamma, tile_rows, steps_per_core):
    c = pl.program_id(0)   # megacore-parallel axis (per-core partial sum)
    j = pl.program_id(1)   # sequential reduction axis

    @pl.when(j == 0)
    def _():
        acc_ref[...] = jnp.zeros_like(acc_ref)

    fl = _focal_elementwise(x_ref[...], t_ref[...], alpha, gamma)

    # Mask the zero-padded tail in-kernel (no mask array streamed from HBM).
    n = n_ref[0]
    row = lax.broadcasted_iota(jnp.int32, (tile_rows, LANES), 0)
    lane = lax.broadcasted_iota(jnp.int32, (tile_rows, LANES), 1)
    base_row = (c * steps_per_core + j) * tile_rows
    flat = (base_row + row) * LANES + lane    # int32: fine for < 2^31 elements
    fl = jnp.where(flat < n, fl, 0.0)

    # Keep the partial sum vreg-shaped: fold tile rows onto 8 sublanes with VPU adds only.
    acc_ref[...] += fl.reshape(tile_rows // SUBLANES, SUBLANES, LANES).sum(axis=0)

    @pl.when(j == pl.num_programs(1) - 1)
    def _():
        psum_ref[0] = acc_ref[...]


def _focal_elem_kernel(x_ref, t_ref, fl_ref, *, alpha, gamma):
    # reduce=False: padded tail is sliced away on the host, so no mask is needed here.
    fl_ref[...] = _focal_elementwise(x_ref[...], t_ref[...], alpha, gamma).astype(fl_ref.dtype)


def _plan_tiles(n, tile_rows):
    rows = pl.cdiv(n, LANES)
    rows = pl.cdiv(rows, SUBLANES) * SUBLANES          # rows multiple of 8
    tile_rows = min(int(tile_rows), rows)
    tile_rows = max(SUBLANES, (tile_rows // SUBLANES) * SUBLANES)
    rows = pl.cdiv(rows, tile_rows) * tile_rows        # rows multiple of tile_rows
    return rows, tile_rows


def focal_loss(inputs, targets, *, alpha=1.0, gamma=2.0, reduce=True,
               tile_rows=DEFAULT_TILE_ROWS):
    """Pallas TPU implementation of FocalLoss.forward."""
    orig_shape = inputs.shape
    n = inputs.size

    rows, tile_rows = _plan_tiles(n, tile_rows)
    n_pad = rows * LANES
    pad = n_pad - n

    # Keep native dtypes (cast to f32 in-kernel); pad only the flat tail when needed.
    x = inputs.reshape(-1)
    t = targets.reshape(-1)
    if pad:
        # TODO(synk): for very large ragged tensors, handle the tail in a separate small
        # call instead of jnp.pad (which copies the whole flat array).
        x = jnp.pad(x, (0, pad))
        t = jnp.pad(t, (0, pad))
    x2 = x.reshape(rows, LANES)
    t2 = t.reshape(rows, LANES)

    steps = rows // tile_rows

    if not reduce:
        tile_spec = pl.BlockSpec((tile_rows, LANES), lambda i: (i, 0))
        fl2 = pl.pallas_call(
            functools.partial(_focal_elem_kernel, alpha=alpha, gamma=gamma),
            out_shape=jax.ShapeDtypeStruct((rows, LANES), inputs.dtype),
            grid_spec=pltpu.PrefetchScalarGridSpec(
                num_scalar_prefetch=0,
                grid=(steps,),
                in_specs=[tile_spec, tile_spec],
                out_specs=tile_spec,
            ),
            compiler_params=pltpu.CompilerParams(
                dimension_semantics=("parallel",),
            ),
        )(x2, t2)
        return fl2.reshape(-1)[:n].reshape(orig_shape)

    # reduce=True: no elementwise HBM writeback; per-core vreg-shaped partial sums.
    splits = 2 if (steps >= 2 and steps % 2 == 0) else 1   # 2-TC sharding on v7x
    steps_per_core = steps // splits

    def in_map(c, j, n_ref):                                # n_ref: scalar-prefetch (unused)
        return (c * steps_per_core + j, 0)

    n_arr = jnp.array([n], dtype=jnp.int32)

    partials = pl.pallas_call(
        functools.partial(_focal_reduce_kernel, alpha=alpha, gamma=gamma,
                          tile_rows=tile_rows, steps_per_core=steps_per_core),
        out_shape=jax.ShapeDtypeStruct((splits, SUBLANES, LANES), jnp.float32),
        grid_spec=pltpu.PrefetchScalarGridSpec(
            num_scalar_prefetch=1,
            grid=(splits, steps_per_core),
            in_specs=[
                pl.BlockSpec((tile_rows, LANES), in_map),
                pl.BlockSpec((tile_rows, LANES), in_map),
            ],
            out_specs=pl.BlockSpec((1, SUBLANES, LANES), lambda c, j, n_ref: (c, 0, 0)),
            scratch_shapes=[pltpu.VMEM((SUBLANES, LANES), jnp.float32)],
        ),
        compiler_params=pltpu.CompilerParams(
            dimension_semantics=("parallel", "arbitrary"),
        ),
    )(n_arr, x2, t2)

    total = jnp.sum(partials)   # tiny cross-lane reduction, done once
    return (total / jnp.float32(n)).astype(inputs.dtype)


def _focal_loss_ref(inputs, targets, *, alpha=1.0, gamma=2.0, reduce=True):
    x = inputs.astype(jnp.float32)
    t = targets.astype(jnp.float32)
    bce = jnp.maximum(x, 0.0) - x * t + jnp.log1p(jnp.exp(-jnp.abs(x)))
    pt = jnp.exp(-bce)
    fl = alpha * (1.0 - pt) ** gamma * bce
    return jnp.mean(fl) if reduce else fl.astype(inputs.dtype)


if __name__ == "__main__":
    key = jax.random.PRNGKey(0)
    k1, k2, k3, k4 = jax.random.split(key, 4)

    # NCHW-style logits and binary targets.
    x = jax.random.normal(k1, (2, 4, 16, 16), dtype=jnp.float32)
    t = (jax.random.uniform(k2, (2, 4, 16, 16)) > 0.5).astype(jnp.float32)

    out_scalar = jax.block_until_ready(focal_loss(x, t, reduce=True))
    out_elem = jax.block_until_ready(focal_loss(x, t, reduce=False))

    ref_scalar = _focal_loss_ref(x, t, reduce=True)
    ref_elem = _focal_loss_ref(x, t, reduce=False)

    assert jnp.allclose(out_scalar, ref_scalar, rtol=1e-5, atol=1e-5)
    assert jnp.allclose(out_elem, ref_elem, rtol=1e-5, atol=1e-5)

    # Ragged, non-(8*128)-aligned size exercises the in-kernel tail mask.
    x2 = jax.random.normal(k3, (3, 5, 17, 13), dtype=jnp.float32)
    t2 = (jax.random.uniform(k4, (3, 5, 17, 13)) > 0.5).astype(jnp.float32)
    out2 = jax.block_until_ready(focal_loss(x2, t2, reduce=True))
    ref2 = _focal_loss_ref(x2, t2, reduce=True)
    assert jnp.allclose(out2, ref2, rtol=1e-5, atol=1e-5)

    print("KERNEL_OK")
</pallas_src>

<mosaic_0001>
module attributes {stable_mosaic.version = 11 : i64} {
  func.func @_focal_reduce_kernel(%arg0: i32, %arg1: i32, %arg2: memref<1xi32, #tpu.memory_space<smem>>, %arg3: memref<16x128xf32, #tpu.memory_space<vmem>>, %arg4: memref<16x128xf32, #tpu.memory_space<vmem>>, %arg5: memref<1x8x128xf32, #tpu.memory_space<vmem>>, %arg6: memref<8x128xf32, #tpu.memory_space<vmem>>) attributes {dimension_semantics = [#tpu.dimension_semantics<parallel>, #tpu.dimension_semantics<arbitrary>], iteration_bounds = array<i64: 1, 1>, scalar_prefetch = 1 : i64, scratch_operands = 1 : i64, tpu.core_type = #tpu.core_type<tc>, window_params = [{transform_indices = @transform_0, window_bounds = array<i64: 16, 128>}, {transform_indices = @transform_1, window_bounds = array<i64: 16, 128>}, {transform_indices = @transform_2, window_bounds = array<i64: 1, 8, 128>}]} {
    %c0_i32 = arith.constant 0 : i32
    %0 = arith.cmpi eq, %arg1, %c0_i32 : i32
    %1 = arith.extui %0 : i1 to i32
    %c0_i32_0 = arith.constant 0 : i32
    %2 = arith.cmpi ne, %1, %c0_i32_0 : i32
    scf.if %2 {
      %cst_17 = arith.constant 0.000000e+00 : f32
      %47 = vector.broadcast %cst_17 : f32 to vector<8x128xf32>
      %c0_18 = arith.constant 0 : index
      %c0_19 = arith.constant 0 : index
      %48 = vector.load %arg6[%c0_18, %c0_19] : memref<8x128xf32, #tpu.memory_space<vmem>>, vector<8x128xf32>
      tpu.vector_store %arg6[%c0_18, %c0_19], %47 {strides = array<i32>} : memref<8x128xf32, #tpu.memory_space<vmem>>, vector<8x128xf32>,
    } else {
    }
    %c0 = arith.constant 0 : index
    %c0_1 = arith.constant 0 : index
    %3 = vector.load %arg3[%c0, %c0_1] : memref<16x128xf32, #tpu.memory_space<vmem>>, vector<16x128xf32>
    %c0_2 = arith.constant 0 : index
    %c0_3 = arith.constant 0 : index
    %4 = vector.load %arg4[%c0_2, %c0_3] : memref<16x128xf32, #tpu.memory_space<vmem>>, vector<16x128xf32>
    %cst = arith.constant 0.000000e+00 : f32
    %5 = vector.broadcast %cst : f32 to vector<16x128xf32>
    %6 = arith.maximumf %3, %5 : vector<16x128xf32>
    %7 = arith.mulf %3, %4 : vector<16x128xf32>
    %8 = arith.subf %6, %7 : vector<16x128xf32>
    %9 = math.absf %3 : vector<16x128xf32>
    %cst_4 = arith.constant 0.000000e+00 : f32
    %10 = vector.broadcast %cst_4 : f32 to vector<16x128xf32>
    %11 = arith.subf %10, %9 : vector<16x128xf32>
    %12 = math.exp %11 : vector<16x128xf32>
    %13 = math.log1p %12 : vector<16x128xf32>
    %14 = arith.addf %8, %13 : vector<16x128xf32>
    %cst_5 = arith.constant 0.000000e+00 : f32
    %15 = vector.broadcast %cst_5 : f32 to vector<16x128xf32>
    %16 = arith.subf %15, %14 : vector<16x128xf32>
    %17 = math.exp %16 : vector<16x128xf32>
    %cst_6 = arith.constant 1.000000e+00 : f32
    %18 = vector.broadcast %cst_6 : f32 to vector<16x128xf32>
    %19 = arith.subf %18, %17 : vector<16x128xf32>
    %20 = arith.mulf %19, %19 : vector<16x128xf32>
    %cst_7 = arith.constant 1.000000e+00 : f32
    %21 = vector.broadcast %cst_7 : f32 to vector<16x128xf32>
    %22 = arith.mulf %21, %20 : vector<16x128xf32>
    %23 = arith.mulf %22, %14 : vector<16x128xf32>
    %c0_8 = arith.constant 0 : index
    %24 = memref.load %arg2[%c0_8] : memref<1xi32, #tpu.memory_space<smem>>
    %25 = tpu.iota {dimensions = array<i32: 0>} : vector<16x128xi32>
    %26 = tpu.iota {dimensions = array<i32: 1>} : vector<16x128xi32>
    %c1_i32 = arith.constant 1 : i32
    %27 = arith.muli %arg0, %c1_i32 : i32
    %28 = arith.addi %27, %arg1 : i32
    %c16_i32 = arith.constant 16 : i32
    %29 = arith.muli %28, %c16_i32 : i32
    %30 = vector.broadcast %29 : i32 to vector<16x128xi32>
    %31 = arith.addi %30, %25 : vector<16x128xi32>
    %c128_i32 = arith.constant 128 : i32
    %32 = vector.broadcast %c128_i32 : i32 to vector<16x128xi32>
    %33 = arith.muli %31, %32 : vector<16x128xi32>
    %34 = arith.addi %33, %26 : vector<16x128xi32>
    %35 = vector.broadcast %24 : i32 to vector<16x128xi32>
    %36 = arith.cmpi slt, %34, %35 : vector<16x128xi32>
    %cst_9 = arith.constant 0.000000e+00 : f32
    %37 = vector.broadcast %cst_9 : f32 to vector<16x128xf32>
    %38 = arith.select %36, %23, %37 : vector<16x128xi1>, vector<16x128xf32>
    %c0_10 = arith.constant 0 : index
    %c0_11 = arith.constant 0 : index
    %39 = vector.load %arg6[%c0_10, %c0_11] : memref<8x128xf32, #tpu.memory_space<vmem>>, vector<8x128xf32>
    %40 = vector.shape_cast %38 : vector<16x128xf32> to vector<2x8x128xf32>
    %cst_12 = arith.constant dense<0.000000e+00> : vector<8x128xf32>
    %41 = vector.multi_reduction <add>, %40, %cst_12 [0] : vector<2x8x128xf32> to vector<8x128xf32>
    %42 = arith.addf %39, %41 : vector<8x128xf32>
    %c0_13 = arith.constant 0 : index
    %c0_14 = arith.constant 0 : index
    %43 = vector.load %arg6[%c0_13, %c0_14] : memref<8x128xf32, #tpu.memory_space<vmem>>, vector<8x128xf32>
    tpu.vector_store %arg6[%c0_13, %c0_14], %42 {strides = array<i32>} : memref<8x128xf32, #tpu.memory_space<vmem>>, vector<8x128xf32>,
    %c0_i32_15 = arith.constant 0 : i32
    %44 = arith.cmpi eq, %arg1, %c0_i32_15 : i32
    %45 = arith.extui %44 : i1 to i32
    %c0_i32_16 = arith.constant 0 : i32
    %46 = arith.cmpi ne, %45, %c0_i32_16 : i32
    scf.if %46 {
      %c0_17 = arith.constant 0 : index
      %c0_18 = arith.constant 0 : index
      %47 = vector.load %arg6[%c0_17, %c0_18] : memref<8x128xf32, #tpu.memory_space<vmem>>, vector<8x128xf32>
      %c0_19 = arith.constant 0 : index
      %c0_20 = arith.constant 0 : index
      %c0_21 = arith.constant 0 : index
      %48 = vector.load %arg5[%c0_19, %c0_20, %c0_21] : memref<1x8x128xf32, #tpu.memory_space<vmem>>, vector<1x8x128xf32>
      %49 = vector.shape_cast %48 : vector<1x8x128xf32> to vector<8x128xf32>
      %50 = vector.shape_cast %47 : vector<8x128xf32> to vector<1x8x128xf32>
      tpu.vector_store %arg5[%c0_19, %c0_20, %c0_21], %50 {strides = array<i32>} : memref<1x8x128xf32, #tpu.memory_space<vmem>>, vector<1x8x128xf32>,
    } else {
    }
    return
  }
  func.func @transform_0(%arg0: i32, %arg1: i32, %arg2: memref<1xi32, #tpu.memory_space<smem>>) -> (i32, i32) {
    %c1_i32 = arith.constant 1 : i32
    %0 = arith.muli %arg0, %c1_i32 : i32
    %1 = arith.addi %0, %arg1 : i32
    %c0_i32 = arith.constant 0 : i32
    %c0_i32_0 = arith.constant 0 : i32
    return %1, %c0_i32 : i32, i32
  }
  func.func @transform_1(%arg0: i32, %arg1: i32, %arg2: memref<1xi32, #tpu.memory_space<smem>>) -> (i32, i32) {
    %c1_i32 = arith.constant 1 : i32
    %0 = arith.muli %arg0, %c1_i32 : i32
    %1 = arith.addi %0, %arg1 : i32
    %c0_i32 = arith.constant 0 : i32
    %c0_i32_0 = arith.constant 0 : i32
    return %1, %c0_i32 : i32, i32
  }
  func.func @transform_2(%arg0: i32, %arg1: i32, %arg2: memref<1xi32, #tpu.memory_space<smem>>) -> (i32, i32, i32) {
    %c0_i32 = arith.constant 0 : i32
    %c0_i32_0 = arith.constant 0 : i32
    %c0_i32_1 = arith.constant 0 : i32
    return %arg0, %c0_i32, %c0_i32_0 : i32, i32, i32
  }
}

</mosaic_0001>

<llo_original>
// kernel: tpu_custom_call.1
$region0: #{tpu_custom_call.1}
  #allocation0 [shape = 'u32[]', space=smem, size = 0x4, offset = 0x4, fixed_abs, tag = 'smem constant byte address 0x4 - core index']
  #allocation1 [shape = 'u32[144,128]{1,0:T(1,128)}', space=vmem, size = 0x12000, scoped, tag = 'internal scratch']
  #allocation2 [shape = 'f32[8,128]{1,0:T(8,128)}', space=vmem, size = 0x1000, scoped, tag = 'scratch operand']
  #allocation3 [shape = 's32[1]{0}', space=sflag, size = 0x4, scoped, tag = 'scoped memory for tpu_custom_call.1']
  #allocation4 [shape = 's32[1]{0:T(128)S(6)}', space=smem, size = 0x200, scoped, tag = 'prefetched SMEM operand 0']
  %s0 = inlined_call_operand.<no memory space> [shape: s32[1], index: 0, kind: input, shape index: {}]
  %s1 = inlined_call_operand.hbm [shape: f32[16,128], index: 1, kind: input, shape index: {}]
  %s2 = inlined_call_operand.hbm [shape: f32[16,128], index: 2, kind: input, shape index: {}]
  %s3 = inlined_call_operand.hbm [shape: f32[1,8,128], index: 3, kind: output, shape index: {}]
  %s4 = sld [smem:[#allocation0]]
  $region34: #{tpu_custom_call.1} parent=0
    _
  %s6 = ssub.s32 1, %s4
  %s7 = scalar_select 0, %s6, %s4
  %8 = sst [smem:[#allocation4]] %s0
  $region1: #{tpu_custom_call.1} parent=0
    #allocation5 [shape = 'u8[8192]{0}', space=vmem, size = 0x2000, scoped, tag = 'input window, operand 1, single buffered']
    #allocation6 [shape = 's32[1]{0}', space=sflag, size = 0x4, scoped, tag = 'scoped memory for tpu_custom_call.1']
    #allocation7 [shape = 's32[1]{0}', space=sflag, size = 0x4, scoped, tag = 'scoped memory for tpu_custom_call.1']
    #allocation8 [shape = 'u8[8192]{0}', space=vmem, size = 0x2000, scoped, tag = 'input window, operand 2, single buffered']
    #allocation9 [shape = 's32[1]{0}', space=sflag, size = 0x4, scoped, tag = 'scoped memory for tpu_custom_call.1']
    #allocation10 [shape = 'u8[4096]{0}', space=vmem, size = 0x1000, scoped, tag = 'output window, operand 0, single buffered']
    %9 = vsyncpa [#allocation6], 0
    %10 = vsyncpa [#allocation9], 0
    %11 = vsyncpa [#allocation7], 0
    // Predicated region
    $region2: #{tpu_custom_call.1} parent=1 // pred_check
      _
    $region3: #{tpu_custom_call.1} parent=1 // pred_check_branch
      %13 = sbr.rel (0) target = $region5
    $region4: #{tpu_custom_call.1} parent=1 // pred_region
      %s14 = sadd.s32 0, 0
      %s15 = smul.u32 2, %s14
      %s17 = ssub.s32 256, 256
      %18 = vsyncadd [#allocation6], %s17
      %s19 = smul.addr %s15, 128
      %s20 = scalar_lea.hbm %s1, %s19
      %s21 = sshll.u32 [#allocation5], 4
      %s22 = int_to_ptr.vmem [resolvable:$true] %s21
      %27 = dma.hbm_to_vmem [thread:$0]  %s20, 256, %s22, [#allocation6], 128, 128, 8
    $region5: #{tpu_custom_call.1} parent=1 // pred_fallthru
      _
    // Predicated region
    $region6: #{tpu_custom_call.1} parent=1 // pred_check
      _
    $region7: #{tpu_custom_call.1} parent=1 // pred_check_branch
      %29 = sbr.rel (0) target = $region9
    $region8: #{tpu_custom_call.1} parent=1 // pred_region
      %s30 = sadd.s32 0, 0
      %s31 = smul.u32 2, %s30
      %s33 = ssub.s32 256, 256
      %34 = vsyncadd [#allocation9], %s33
      %s35 = smul.addr %s31, 128
      %s36 = scalar_lea.hbm %s2, %s35
      %s37 = sshll.u32 [#allocation8], 4
      %s38 = int_to_ptr.vmem [resolvable:$true] %s37
      %43 = dma.hbm_to_vmem [thread:$0]  %s36, 256, %s38, [#allocation9], 128, 128, 8
    $region9: #{tpu_custom_call.1} parent=1 // pred_fallthru
      _
    // Predicated region
    $region10: #{tpu_custom_call.1} parent=1 // pred_check
      _
    $region11: #{tpu_custom_call.1} parent=1 // pred_check_branch
      %45 = sbr.rel (0) target = $region13
    $region12: #{tpu_custom_call.1} parent=1 // pred_region
      %46 = dma.done [#allocation6], 256
    $region13: #{tpu_custom_call.1} parent=1 // pred_fallthru
      _
    // Predicated region
    $region14: #{tpu_custom_call.1} parent=1 // pred_check
      _
    $region15: #{tpu_custom_call.1} parent=1 // pred_check_branch
      %48 = sbr.rel (0) target = $region17
    $region16: #{tpu_custom_call.1} parent=1 // pred_region
      %49 = dma.done [#allocation9], 256
    $region17: #{tpu_custom_call.1} parent=1 // pred_fallthru
      _
    %s50 = sadd.s32 0, 0
    %s51 = smul.u32 2, %s50
    %s52 = sadd.s32 0, 0
    %s53 = smul.u32 2, %s52
    %p54 = scmp.eq.s32.totalorder 0, 0
    // Predicated region
    $region18: #{tpu_custom_call.1} parent=1 // pred_check
      %p55 = pneg %p54
    $region19: #{tpu_custom_call.1} parent=1 // pred_check_branch
      %57 = sbr.rel (%p55) target = $region21
    $region20: #{tpu_custom_call.1} parent=1 // pred_region
      %58 = vst [vmem:[#allocation2] sm:$0xff] 0.0
    $region21: #{tpu_custom_call.1} parent=1 // pred_fallthru
      _
    %v59 = vld [vmem:[#allocation5] sm:$0xff]
    %v60 = vld [vmem:[#allocation5 + $0x8] sm:$0xff]
    %v61 = vld [vmem:[#allocation8] sm:$0xff]
    %v62 = vld [vmem:[#allocation8 + $0x8] sm:$0xff]
    %v63 = vmax.f32 %v59, 0.0
    %v64 = vmax.f32 %v60, 0.0
    %v65 = vmul.f32 %v59, %v61
    %v66 = vmul.f32 %v60, %v62
    %v67 = vsub.f32 %v63, %v65
    %v68 = vsub.f32 %v64, %v66
    %v69 = vand.u32 2147483647, %v59
    %v70 = vand.u32 2147483647, %v60
    %v71 = vsub.f32 0.0, %v69
    %v72 = vsub.f32 0.0, %v70
    %v73 = vmul.f32 %v71, 1.442695
    %v74 = vpow.pop %v73
    %v75 = vmul.f32 %v72, 1.442695
    %v76 = vpow.pop %v75
    %v77 = vadd.f32 %v74, 1.0
    %v78 = vlog2.pop %v77
    %v79 = vmul.f32 %v78, 0.6931472
    %v80 = vmul.f32 -0.5, %v74
    %v81 = vadd.f32 %v80, 1.0
    %v82 = vmul.f32 %v81, %v74
    %v83 = vand.u32 2147483647, %v74
    %vm84 = vcmp.lt.f32.partialorder %v83, 0.0004427343
    %v85 = vsel %vm84, %v82, %v79
    %v86 = vadd.f32 %v76, 1.0
    %v87 = vlog2.pop %v86
    %v88 = vmul.f32 %v87, 0.6931472
    %v89 = vmul.f32 -0.5, %v76
    %v90 = vadd.f32 %v89, 1.0
    %v91 = vmul.f32 %v90, %v76
    %v92 = vand.u32 2147483647, %v76
    %vm93 = vcmp.lt.f32.partialorder %v92, 0.0004427343
    %v94 = vsel %vm93, %v91, %v88
    %v95 = vadd.f32 %v67, %v85
    %v96 = vadd.f32 %v68, %v94
    %v97 = vsub.f32 0.0, %v95
    %v98 = vsub.f32 0.0, %v96
    %v99 = vmul.f32 %v97, 1.442695
    %v100 = vpow.pop %v99
    %v101 = vmul.f32 %v98, 1.442695
    %v102 = vpow.pop %v101
    %v103 = vsub.f32 1.0, %v100
    %v104 = vsub.f32 1.0, %v102
    %v105 = vmul.f32 %v103, %v103
    %v106 = vmul.f32 %v104, %v104
    %v107 = vmul.f32 %v105, %v95
    %v108 = vmul.f32 %v106, %v96
    %s109 = sld [smem:[#allocation4]]
    %v110 = vlaneseq
    %v111 = vshrl.u32 %v110, 7
    %v112 = vadd.s32 %v111, 8
    %v113 = vlaneseq
    %v114 = vand.u32 %v113, 127
    %s115 = sadd.s32 0, 0
    %s116 = smul.u32 %s115, 16
    %v117 = vstv %s116
    %v118 = vadd.s32 %v117, %v111
    %v119 = vadd.s32 %v117, %v112
    %v120 = vmul.u32 %v118, 128
    %v121 = vmul.u32 %v119, 128
    %v122 = vadd.s32 %v120, %v114
    %v123 = vadd.s32 %v121, %v114
    %v124 = vstv %s109
    %vm125 = vcmp.lt.s32.totalorder %v122, %v124
    %vm126 = vcmp.lt.s32.totalorder %v123, %v124
    %v127 = vsel %vm125, %v107, 0.0
    %v128 = vsel %vm126, %v108, 0.0
    %v129 = vld [vmem:[#allocation2] sm:$0xff]
    %v130 = vadd.f32 %v127, %v128
    %v131 = vadd.f32 %v129, %v130
    %132 = vst [vmem:[#allocation2] sm:$0xff] %v131
    // Predicated region
    $region22: #{tpu_custom_call.1} parent=1 // pred_check
      %p133 = pneg %p54
    $region23: #{tpu_custom_call.1} parent=1 // pred_check_branch
      %135 = sbr.rel (%p133) target = $region25
    $region24: #{tpu_custom_call.1} parent=1 // pred_region
      %v136 = vld [vmem:[#allocation2] sm:$0xff]
      %137 = vst [vmem:[#allocation10] sm:$0xff] %v136
    $region25: #{tpu_custom_call.1} parent=1 // pred_fallthru
      _
    // Predicated region
    $region26: #{tpu_custom_call.1} parent=1 // pred_check
      _
    $region27: #{tpu_custom_call.1} parent=1 // pred_check_branch
      %139 = sbr.rel (0) target = $region29
    $region28: #{tpu_custom_call.1} parent=1 // pred_region
      %s141 = ssub.s32 128, 128
      %142 = vsyncadd [#allocation7], %s141
      %s144 = sshll.u32 [#allocation10], 4
      %s145 = int_to_ptr.vmem [resolvable:$true] %s144
      %147 = dma.vmem_to_hbm [thread:$0]  %s145, 128, %s3, [#allocation7]
    $region29: #{tpu_custom_call.1} parent=1 // pred_fallthru
      _
    // Predicated region
    $region30: #{tpu_custom_call.1} parent=1 // pred_check
      _
    $region31: #{tpu_custom_call.1} parent=1 // pred_check_branch
      %149 = sbr.rel (0) target = $region33
    $region32: #{tpu_custom_call.1} parent=1 // pred_region
      %150 = dma.done [#allocation7], 128
    $region33: #{tpu_custom_call.1} parent=1 // pred_fallthru
      _
    %151 = vsyncpa [#allocation6], 1
    %152 = vsyncpa [#allocation9], 1
    %153 = vsyncpa [#allocation7], 1

</llo_original>
